<compile_context>
chip_gen: v7x
topology: tpu7x:2x2x1
jax: 0.10.0
libtpu: 0.0.40
codegen_flags: <defaults>
</compile_context>

<pallas_src>
import jax
import jax.numpy as jnp
from jax import lax
from jax.experimental import pallas as pl
from jax.experimental.pallas import tpu as pltpu


NUM_CLASSES = 2
PADDED_CLASSES = 128  # lane-dense output width


def dan_kernel(tokens_ref,                       # SMEM [B*L] int32 (scalar prefetch)
               table_ref,                        # HBM  [V, E] f32 (pl.ANY)
               w1_ref, b1_ref, w2_ref, b2_ref,   # VMEM weights
               w3_ref, b3_ref,                   # VMEM padded head [H,128],[1,128]
               out_ref,                          # VMEM [B, 128] f32
               gathered_ref,                     # VMEM scratch [B*L, E]
               sem_ref):                         # DMA sems (2,)
    n_tok = gathered_ref.shape[0]                # B * L (static)
    E = gathered_ref.shape[1]
    B = out_ref.shape[0]
    L = n_tok // B

    # ---- embedding gather: DMA only the B*L needed rows, double-buffered ----
    def start_row(i, slot):
        tok = tokens_ref[i]
        pltpu.make_async_copy(
            table_ref.at[pl.ds(tok, 1)],
            gathered_ref.at[pl.ds(i, 1)],
            sem_ref.at[slot],
        ).start()

    def wait_row(i, slot):
        pltpu.make_async_copy(
            table_ref.at[pl.ds(0, 1)],            # shape/size descriptor only
            gathered_ref.at[pl.ds(i, 1)],
            sem_ref.at[slot],
        ).wait()

    # Prologue: two row-DMAs in flight.
    start_row(0, 0)
    start_row(1, 1)

    def gather_body(i, carry):
        slot = lax.rem(i, 2)
        wait_row(i, slot)

        @pl.when(i + 2 < n_tok)
        def _():
            start_row(i + 2, slot)

        return carry

    lax.fori_loop(0, n_tok, gather_body, 0)

    # ---- mean over sequence: [B, B*L] pooling matmul (1/L folded in) --------
    inv_len = jnp.float32(1.0 / L)
    col = lax.broadcasted_iota(jnp.int32, (B, n_tok), 1)
    row = lax.broadcasted_iota(jnp.int32, (B, n_tok), 0)
    in_seg = (col >= row * L) & (col < (row + 1) * L)
    pool = jnp.where(in_seg, inv_len, jnp.float32(0.0))           # [B, B*L]
    averaged = jnp.dot(pool, gathered_ref[...],
                       preferred_element_type=jnp.float32)        # [B, E]

    # ---- fc1 + ReLU ---------------------------------------------------------
    h1 = jnp.dot(averaged, w1_ref[...], preferred_element_type=jnp.float32)
    h1 = jnp.maximum(h1 + b1_ref[...], 0.0)

    # ---- fc2 + ReLU ---------------------------------------------------------
    h2 = jnp.dot(h1, w2_ref[...], preferred_element_type=jnp.float32)
    h2 = jnp.maximum(h2 + b2_ref[...], 0.0)

    # ---- fc3 (class dim padded to 128 lanes) --------------------------------
    logits = jnp.dot(h2, w3_ref[...], preferred_element_type=jnp.float32)
    logits = logits + b3_ref[...]                                 # [B, 128]

    # ---- LogSoftmax over the 2 valid lanes (padding masked to -inf) ---------
    lane_ids = lax.broadcasted_iota(jnp.int32, logits.shape, 1)
    valid = lane_ids < NUM_CLASSES
    masked = jnp.where(valid, logits, jnp.float32(-jnp.inf))
    m = jnp.max(masked, axis=1, keepdims=True)
    shifted = masked - m                       # padded lanes: -inf -> exp = 0
    lse = jnp.log(jnp.sum(jnp.exp(shifted), axis=1, keepdims=True))
    out_ref[...] = jnp.where(valid, shifted - lse, 0.0)


def dan_forward(tokens, emb_table, w1, b1, w2, b2, w3p, b3p):
    # torch casts indices to int64; int32 is the native TPU index width.
    tokens = tokens.astype(jnp.int32)
    B, L = tokens.shape
    V, E = emb_table.shape
    H = w1.shape[1]
    tokens_flat = tokens.reshape(B * L)

    vmem = pl.BlockSpec(memory_space=pltpu.MemorySpace.VMEM)
    hbm = pl.BlockSpec(memory_space=pl.ANY)   # table stays in HBM; rows DMA'd on demand

    grid_spec = pltpu.PrefetchScalarGridSpec(
        num_scalar_prefetch=1,                # tokens land in SMEM
        grid=(1,),                            # single step; grid over B only pays at large B
        in_specs=[hbm, vmem, vmem, vmem, vmem, vmem, vmem],
        out_specs=vmem,
        scratch_shapes=[
            pltpu.VMEM((B * L, E), emb_table.dtype),   # gathered embedding rows
            pltpu.SemaphoreType.DMA((2,)),             # double-buffered row DMAs
        ],
    )

    flops = 2 * B * (B * L * E + E * H + H * H + H * PADDED_CLASSES)
    bytes_accessed = (
        tokens_flat.size * 4
        + B * L * E * 4                        # only the gathered rows, not the table
        + w1.size * 4 + b1.size * 4 + w2.size * 4 + b2.size * 4
        + w3p.size * 4 + b3p.size * 4
        + B * PADDED_CLASSES * 4
    )
    cost = pl.CostEstimate(flops=flops,
                           transcendentals=B * (PADDED_CLASSES + 1),
                           bytes_accessed=bytes_accessed)

    out = pl.pallas_call(
        dan_kernel,
        out_shape=jax.ShapeDtypeStruct((B, PADDED_CLASSES), jnp.float32),
        grid_spec=grid_spec,
        compiler_params=pltpu.CompilerParams(
            dimension_semantics=("arbitrary",)),
        cost_estimate=cost,
    )(tokens_flat, emb_table, w1, b1, w2, b2, w3p, b3p)

    # Slice the 2 valid classes back out (lane-dense store inside the kernel).
    return out[:, :NUM_CLASSES]


def make_params(key, vocab_size, input_size, hidden_size):
    k_emb, k1, k2, k3, kb1, kb2, kb3 = jax.random.split(key, 7)
    emb_table = jax.random.normal(k_emb, (vocab_size, input_size), jnp.float32)
    # Linear weights stored [in, out] (transpose of PyTorch's [out, in]);
    # biases stored [1, out] for clean broadcast.
    w1 = jax.random.normal(k1, (input_size, hidden_size), jnp.float32) * 0.1
    b1 = jax.random.normal(kb1, (1, hidden_size), jnp.float32) * 0.1
    w2 = jax.random.normal(k2, (hidden_size, hidden_size), jnp.float32) * 0.1
    b2 = jax.random.normal(kb2, (1, hidden_size), jnp.float32) * 0.1
    w3 = jax.random.normal(k3, (hidden_size, NUM_CLASSES), jnp.float32) * 0.1
    b3 = jax.random.normal(kb3, (1, NUM_CLASSES), jnp.float32) * 0.1
    # Pad the 2-class head to a lane-dense 128-wide slab ONCE at init (not per call).
    w3p = jnp.zeros((hidden_size, PADDED_CLASSES), jnp.float32).at[:, :NUM_CLASSES].set(w3)
    b3p = jnp.zeros((1, PADDED_CLASSES), jnp.float32).at[:, :NUM_CLASSES].set(b3)
    return emb_table, w1, b1, w2, b2, w3p, b3p


if __name__ == "__main__":
    # Small shapes consistent with the module's forward:
    #   batch B=8, sequence length L=8, vocab V=32,
    #   input_size (embedding dim) E=32, hidden_size H=32, 2 output classes.
    B, L, V, E, H = 8, 8, 32, 32, 32

    key = jax.random.PRNGKey(0)
    k_tok, k_params = jax.random.split(key)
    tokens = jax.random.randint(k_tok, (B, L), 0, V, dtype=jnp.int32)
    params = make_params(k_params, V, E, H)

    out = dan_forward(tokens, *params)
    out = jax.block_until_ready(out)

    # Pure-JAX reference (same math as the torch forward).
    emb_table, w1, b1, w2, b2, w3p, b3p = params
    embedded = jnp.take(emb_table, tokens, axis=0)
    averaged = jnp.mean(embedded, axis=1)
    h1 = jnp.maximum(averaged @ w1 + b1, 0.0)
    h2 = jnp.maximum(h1 @ w2 + b2, 0.0)
    logits = h2 @ w3p[:, :NUM_CLASSES] + b3p[:, :NUM_CLASSES]
    ref = jax.nn.log_softmax(logits, axis=1)

    assert out.shape == (B, NUM_CLASSES)
    assert jnp.allclose(out, ref, atol=1e-4, rtol=1e-4)
    print("KERNEL_OK")
</pallas_src>

<mosaic_0001>
module attributes {stable_mosaic.version = 11 : i64} {
  func.func @dan_kernel(%arg0: i32, %arg1: memref<64xi32, #tpu.memory_space<smem>>, %arg2: memref<32x32xf32, #tpu.memory_space<any>>, %arg3: memref<32x32xf32, #tpu.memory_space<vmem>>, %arg4: memref<1x32xf32, #tpu.memory_space<vmem>>, %arg5: memref<32x32xf32, #tpu.memory_space<vmem>>, %arg6: memref<1x32xf32, #tpu.memory_space<vmem>>, %arg7: memref<32x128xf32, #tpu.memory_space<vmem>>, %arg8: memref<1x128xf32, #tpu.memory_space<vmem>>, %arg9: memref<8x128xf32, #tpu.memory_space<vmem>>, %arg10: memref<64x32xf32, #tpu.memory_space<vmem>>, %arg11: memref<2x!tpu.dma_semaphore, #tpu.memory_space<semaphore_mem>>) attributes {dimension_semantics = [#tpu.dimension_semantics<arbitrary>], iteration_bounds = array<i64: 1>, scalar_prefetch = 1 : i64, scratch_operands = 2 : i64, tpu.core_type = #tpu.core_type<tc>, window_params = [{}, {pipeline_mode = #tpu.pipeline_mode<synchronous>, transform_indices = @transform_1, window_bounds = array<i64: 32, 32>}, {pipeline_mode = #tpu.pipeline_mode<synchronous>, transform_indices = @transform_2, window_bounds = array<i64: 1, 32>}, {pipeline_mode = #tpu.pipeline_mode<synchronous>, transform_indices = @transform_3, window_bounds = array<i64: 32, 32>}, {pipeline_mode = #tpu.pipeline_mode<synchronous>, transform_indices = @transform_4, window_bounds = array<i64: 1, 32>}, {pipeline_mode = #tpu.pipeline_mode<synchronous>, transform_indices = @transform_5, window_bounds = array<i64: 32, 128>}, {pipeline_mode = #tpu.pipeline_mode<synchronous>, transform_indices = @transform_6, window_bounds = array<i64: 1, 128>}, {pipeline_mode = #tpu.pipeline_mode<synchronous>, transform_indices = @transform_7, window_bounds = array<i64: 8, 128>}]} {
    %c0 = arith.constant 0 : index
    %0 = memref.load %arg1[%c0] : memref<64xi32, #tpu.memory_space<smem>>
    %c0_i32 = arith.constant 0 : i32
    %c0_i32_0 = arith.constant 0 : i32
    %1 = tpu.memref_slice %arg2[%0, %c0_i32_0] : memref<32x32xf32, #tpu.memory_space<any>> -> memref<1x32xf32, #tpu.memory_space<any>>
    %c0_i32_1 = arith.constant 0 : i32
    %c0_i32_2 = arith.constant 0 : i32
    %2 = tpu.memref_slice %arg10[%c0_i32_1, %c0_i32_2] : memref<64x32xf32, #tpu.memory_space<vmem>> -> memref<1x32xf32, #tpu.memory_space<vmem>>
    %3 = tpu.memref_slice %arg11[%c0_i32] : memref<2x!tpu.dma_semaphore, #tpu.memory_space<semaphore_mem>> -> memref<1x!tpu.dma_semaphore, #tpu.memory_space<semaphore_mem>>
    %4 = tpu.memref_squeeze %3 : memref<1x!tpu.dma_semaphore, #tpu.memory_space<semaphore_mem>> -> memref<!tpu.dma_semaphore, #tpu.memory_space<semaphore_mem>>
    tpu.enqueue_dma source(%1 : memref<1x32xf32, #tpu.memory_space<any>>) target(%2 : memref<1x32xf32, #tpu.memory_space<vmem>>) target_semaphore(%4 : memref<!tpu.dma_semaphore, #tpu.memory_space<semaphore_mem>>)
    %c1 = arith.constant 1 : index
    %5 = memref.load %arg1[%c1] : memref<64xi32, #tpu.memory_space<smem>>
    %c1_i32 = arith.constant 1 : i32
    %c0_i32_3 = arith.constant 0 : i32
    %6 = tpu.memref_slice %arg2[%5, %c0_i32_3] : memref<32x32xf32, #tpu.memory_space<any>> -> memref<1x32xf32, #tpu.memory_space<any>>
    %c1_i32_4 = arith.constant 1 : i32
    %c0_i32_5 = arith.constant 0 : i32
    %7 = tpu.memref_slice %arg10[%c1_i32_4, %c0_i32_5] : memref<64x32xf32, #tpu.memory_space<vmem>> -> memref<1x32xf32, #tpu.memory_space<vmem>>
    %8 = tpu.memref_slice %arg11[%c1_i32] : memref<2x!tpu.dma_semaphore, #tpu.memory_space<semaphore_mem>> -> memref<1x!tpu.dma_semaphore, #tpu.memory_space<semaphore_mem>>
    %9 = tpu.memref_squeeze %8 : memref<1x!tpu.dma_semaphore, #tpu.memory_space<semaphore_mem>> -> memref<!tpu.dma_semaphore, #tpu.memory_space<semaphore_mem>>
    tpu.enqueue_dma source(%6 : memref<1x32xf32, #tpu.memory_space<any>>) target(%7 : memref<1x32xf32, #tpu.memory_space<vmem>>) target_semaphore(%9 : memref<!tpu.dma_semaphore, #tpu.memory_space<semaphore_mem>>)
    %c0_i32_6 = arith.constant 0 : i32
    %c64_i32 = arith.constant 64 : i32
    %10 = arith.addi %c0_i32_6, %c64_i32 : i32
    %c1_i32_7 = arith.constant 1 : i32
    scf.for %arg12 = %c0_i32_6 to %10 step %c1_i32_7  : i32 {
      %c2_i32_38 = arith.constant 2 : i32
      %64 = arith.remsi %arg12, %c2_i32_38 : i32
      %c0_i32_39 = arith.constant 0 : i32
      %c0_i32_40 = arith.constant 0 : i32
      %65 = tpu.memref_slice %arg2[%c0_i32_39, %c0_i32_40] : memref<32x32xf32, #tpu.memory_space<any>> -> memref<1x32xf32, #tpu.memory_space<any>>
      %c0_i32_41 = arith.constant 0 : i32
      %66 = tpu.memref_slice %arg10[%arg12, %c0_i32_41] : memref<64x32xf32, #tpu.memory_space<vmem>> -> memref<1x32xf32, #tpu.memory_space<vmem>>
      %67 = tpu.memref_slice %arg11[%64] : memref<2x!tpu.dma_semaphore, #tpu.memory_space<semaphore_mem>> -> memref<1x!tpu.dma_semaphore, #tpu.memory_space<semaphore_mem>>
      %68 = tpu.memref_squeeze %67 : memref<1x!tpu.dma_semaphore, #tpu.memory_space<semaphore_mem>> -> memref<!tpu.dma_semaphore, #tpu.memory_space<semaphore_mem>>
      tpu.wait_dma2 semaphore(%68 : memref<!tpu.dma_semaphore, #tpu.memory_space<semaphore_mem>>) src(%65 : memref<1x32xf32, #tpu.memory_space<any>>) dst(%66 : memref<1x32xf32, #tpu.memory_space<vmem>>)
      %c2_i32_42 = arith.constant 2 : i32
      %69 = arith.addi %arg12, %c2_i32_42 : i32
      %c64_i32_43 = arith.constant 64 : i32
      %70 = arith.cmpi slt, %69, %c64_i32_43 : i32
      %71 = arith.extui %70 : i1 to i32
      %c0_i32_44 = arith.constant 0 : i32
      %72 = arith.cmpi ne, %71, %c0_i32_44 : i32
      scf.if %72 {
        %c2_i32_45 = arith.constant 2 : i32
        %73 = arith.addi %arg12, %c2_i32_45 : i32
        %74 = arith.index_cast %73 : i32 to index
        %75 = memref.load %arg1[%74] : memref<64xi32, #tpu.memory_space<smem>>
        %c0_i32_46 = arith.constant 0 : i32
        %76 = tpu.memref_slice %arg2[%75, %c0_i32_46] : memref<32x32xf32, #tpu.memory_space<any>> -> memref<1x32xf32, #tpu.memory_space<any>>
        %c0_i32_47 = arith.constant 0 : i32
        %77 = tpu.memref_slice %arg10[%73, %c0_i32_47] : memref<64x32xf32, #tpu.memory_space<vmem>> -> memref<1x32xf32, #tpu.memory_space<vmem>>
        %78 = tpu.memref_slice %arg11[%64] : memref<2x!tpu.dma_semaphore, #tpu.memory_space<semaphore_mem>> -> memref<1x!tpu.dma_semaphore, #tpu.memory_space<semaphore_mem>>
        %79 = tpu.memref_squeeze %78 : memref<1x!tpu.dma_semaphore, #tpu.memory_space<semaphore_mem>> -> memref<!tpu.dma_semaphore, #tpu.memory_space<semaphore_mem>>
        tpu.enqueue_dma source(%76 : memref<1x32xf32, #tpu.memory_space<any>>) target(%77 : memref<1x32xf32, #tpu.memory_space<vmem>>) target_semaphore(%79 : memref<!tpu.dma_semaphore, #tpu.memory_space<semaphore_mem>>)
      } else {
      }
    }
    %c64_i32_8 = arith.constant 64 : i32
    %11 = tpu.iota {dimensions = array<i32: 1>} : vector<8x64xi32>
    %12 = tpu.iota {dimensions = array<i32: 0>} : vector<8x64xi32>
    %c8_i32 = arith.constant 8 : i32
    %13 = vector.broadcast %c8_i32 : i32 to vector<8x64xi32>
    %14 = arith.muli %12, %13 : vector<8x64xi32>
    %15 = arith.cmpi sge, %11, %14 : vector<8x64xi32>
    %c1_i32_9 = arith.constant 1 : i32
    %16 = vector.broadcast %c1_i32_9 : i32 to vector<8x64xi32>
    %17 = arith.addi %12, %16 : vector<8x64xi32>
    %c8_i32_10 = arith.constant 8 : i32
    %18 = vector.broadcast %c8_i32_10 : i32 to vector<8x64xi32>
    %19 = arith.muli %17, %18 : vector<8x64xi32>
    %20 = arith.cmpi slt, %11, %19 : vector<8x64xi32>
    %21 = arith.andi %15, %20 : vector<8x64xi1>
    %cst = arith.constant 1.250000e-01 : f32
    %cst_11 = arith.constant 0.000000e+00 : f32
    %22 = vector.broadcast %cst : f32 to vector<8x64xf32>
    %23 = vector.broadcast %cst_11 : f32 to vector<8x64xf32>
    %24 = arith.select %21, %22, %23 : vector<8x64xi1>, vector<8x64xf32>
    %c0_12 = arith.constant 0 : index
    %c0_13 = arith.constant 0 : index
    %25 = vector.load %arg10[%c0_12, %c0_13] : memref<64x32xf32, #tpu.memory_space<vmem>>, vector<64x32xf32>
    %cst_14 = arith.constant dense<0.000000e+00> : vector<8x32xf32>
    %26 = tpu.matmul %24, %25, %cst_14 {dimension_numbers = #tpu.dot_dimension_numbers<[1], [0], [0], [1], [0, 0, 1, 1], [], []>} : vector<8x64xf32>, vector<64x32xf32>, vector<8x32xf32> -> vector<8x32xf32>
    %c0_15 = arith.constant 0 : index
    %c0_16 = arith.constant 0 : index
    %27 = vector.load %arg3[%c0_15, %c0_16] : memref<32x32xf32, #tpu.memory_space<vmem>>, vector<32x32xf32>
    %cst_17 = arith.constant dense<0.000000e+00> : vector<8x32xf32>
    %28 = tpu.matmul %26, %27, %cst_17 {dimension_numbers = #tpu.dot_dimension_numbers<[1], [0], [0], [1], [0, 0, 1, 1], [], []>} : vector<8x32xf32>, vector<32x32xf32>, vector<8x32xf32> -> vector<8x32xf32>
    %c0_18 = arith.constant 0 : index
    %c0_19 = arith.constant 0 : index
    %29 = vector.load %arg4[%c0_18, %c0_19] : memref<1x32xf32, #tpu.memory_space<vmem>>, vector<1x32xf32>
    %30 = vector.broadcast %29 : vector<1x32xf32> to vector<8x32xf32>
    %31 = arith.addf %28, %30 : vector<8x32xf32>
    %cst_20 = arith.constant 0.000000e+00 : f32
    %32 = vector.broadcast %cst_20 : f32 to vector<8x32xf32>
    %33 = arith.maximumf %31, %32 : vector<8x32xf32>
    %c0_21 = arith.constant 0 : index
    %c0_22 = arith.constant 0 : index
    %34 = vector.load %arg5[%c0_21, %c0_22] : memref<32x32xf32, #tpu.memory_space<vmem>>, vector<32x32xf32>
    %cst_23 = arith.constant dense<0.000000e+00> : vector<8x32xf32>
    %35 = tpu.matmul %33, %34, %cst_23 {dimension_numbers = #tpu.dot_dimension_numbers<[1], [0], [0], [1], [0, 0, 1, 1], [], []>} : vector<8x32xf32>, vector<32x32xf32>, vector<8x32xf32> -> vector<8x32xf32>
    %c0_24 = arith.constant 0 : index
    %c0_25 = arith.constant 0 : index
    %36 = vector.load %arg6[%c0_24, %c0_25] : memref<1x32xf32, #tpu.memory_space<vmem>>, vector<1x32xf32>
    %37 = vector.broadcast %36 : vector<1x32xf32> to vector<8x32xf32>
    %38 = arith.addf %35, %37 : vector<8x32xf32>
    %cst_26 = arith.constant 0.000000e+00 : f32
    %39 = vector.broadcast %cst_26 : f32 to vector<8x32xf32>
    %40 = arith.maximumf %38, %39 : vector<8x32xf32>
    %c0_27 = arith.constant 0 : index
    %c0_28 = arith.constant 0 : index
    %41 = vector.load %arg7[%c0_27, %c0_28] : memref<32x128xf32, #tpu.memory_space<vmem>>, vector<32x128xf32>
    %cst_29 = arith.constant dense<0.000000e+00> : vector<8x128xf32>
    %42 = tpu.matmul %40, %41, %cst_29 {dimension_numbers = #tpu.dot_dimension_numbers<[1], [0], [0], [1], [0, 0, 1, 1], [], []>} : vector<8x32xf32>, vector<32x128xf32>, vector<8x128xf32> -> vector<8x128xf32>
    %c0_30 = arith.constant 0 : index
    %c0_31 = arith.constant 0 : index
    %43 = vector.load %arg8[%c0_30, %c0_31] : memref<1x128xf32, #tpu.memory_space<vmem>>, vector<1x128xf32>
    %44 = vector.broadcast %43 : vector<1x128xf32> to vector<8x128xf32>
    %45 = arith.addf %42, %44 : vector<8x128xf32>
    %46 = tpu.iota {dimensions = array<i32: 1>} : vector<8x128xi32>
    %c2_i32 = arith.constant 2 : i32
    %47 = vector.broadcast %c2_i32 : i32 to vector<8x128xi32>
    %48 = arith.cmpi slt, %46, %47 : vector<8x128xi32>
    %cst_32 = arith.constant 0xFF800000 : f32
    %49 = vector.broadcast %cst_32 : f32 to vector<8x128xf32>
    %50 = arith.select %48, %45, %49 : vector<8x128xi1>, vector<8x128xf32>
    %cst_33 = arith.constant dense<0xFF800000> : vector<8xf32>
    %51 = vector.multi_reduction <maximumf>, %50, %cst_33 [1] : vector<8x128xf32> to vector<8xf32>
    %52 = vector.shape_cast %51 : vector<8xf32> to vector<8x1xf32>
    %53 = vector.broadcast %52 : vector<8x1xf32> to vector<8x128xf32>
    %54 = arith.subf %50, %53 : vector<8x128xf32>
    %55 = math.exp %54 : vector<8x128xf32>
    %cst_34 = arith.constant dense<0.000000e+00> : vector<8xf32>
    %56 = vector.multi_reduction <add>, %55, %cst_34 [1] : vector<8x128xf32> to vector<8xf32>
    %57 = vector.shape_cast %56 : vector<8xf32> to vector<8x1xf32>
    %58 = math.log %57 : vector<8x1xf32>
    %59 = vector.broadcast %58 : vector<8x1xf32> to vector<8x128xf32>
    %60 = arith.subf %54, %59 : vector<8x128xf32>
    %cst_35 = arith.constant 0.000000e+00 : f32
    %61 = vector.broadcast %cst_35 : f32 to vector<8x128xf32>
    %62 = arith.select %48, %60, %61 : vector<8x128xi1>, vector<8x128xf32>
    %c0_36 = arith.constant 0 : index
    %c0_37 = arith.constant 0 : index
    %63 = vector.load %arg9[%c0_36, %c0_37] : memref<8x128xf32, #tpu.memory_space<vmem>>, vector<8x128xf32>
    tpu.vector_store %arg9[%c0_36, %c0_37], %62 {strides = array<i32>} : memref<8x128xf32, #tpu.memory_space<vmem>>, vector<8x128xf32>,
    return
  }
  func.func @transform_1(%arg0: i32, %arg1: memref<64xi32, #tpu.memory_space<smem>>) -> (i32, i32) {
    %c0_i32 = arith.constant 0 : i32
    %c0_i32_0 = arith.constant 0 : i32
    %c0_i32_1 = arith.constant 0 : i32
    return %c0_i32, %c0_i32_0 : i32, i32
  }
  func.func @transform_2(%arg0: i32, %arg1: memref<64xi32, #tpu.memory_space<smem>>) -> (i32, i32) {
    %c0_i32 = arith.constant 0 : i32
    %c0_i32_0 = arith.constant 0 : i32
    %c0_i32_1 = arith.constant 0 : i32
    return %c0_i32, %c0_i32_0 : i32, i32
  }
  func.func @transform_3(%arg0: i32, %arg1: memref<64xi32, #tpu.memory_space<smem>>) -> (i32, i32) {
    %c0_i32 = arith.constant 0 : i32
    %c0_i32_0 = arith.constant 0 : i32
    %c0_i32_1 = arith.constant 0 : i32
    return %c0_i32, %c0_i32_0 : i32, i32
  }
  func.func @transform_4(%arg0: i32, %arg1: memref<64xi32, #tpu.memory_space<smem>>) -> (i32, i32) {
    %c0_i32 = arith.constant 0 : i32
    %c0_i32_0 = arith.constant 0 : i32
    %c0_i32_1 = arith.constant 0 : i32
    return %c0_i32, %c0_i32_0 : i32, i32
  }
  func.func @transform_5(%arg0: i32, %arg1: memref<64xi32, #tpu.memory_space<smem>>) -> (i32, i32) {
    %c0_i32 = arith.constant 0 : i32
    %c0_i32_0 = arith.constant 0 : i32
    %c0_i32_1 = arith.constant 0 : i32
    return %c0_i32, %c0_i32_0 : i32, i32
  }
  func.func @transform_6(%arg0: i32, %arg1: memref<64xi32, #tpu.memory_space<smem>>) -> (i32, i32) {
    %c0_i32 = arith.constant 0 : i32
    %c0_i32_0 = arith.constant 0 : i32
    %c0_i32_1 = arith.constant 0 : i32
    return %c0_i32, %c0_i32_0 : i32, i32
  }
  func.func @transform_7(%arg0: i32, %arg1: memref<64xi32, #tpu.memory_space<smem>>) -> (i32, i32) {
    %c0_i32 = arith.constant 0 : i32
    %c0_i32_0 = arith.constant 0 : i32
    %c0_i32_1 = arith.constant 0 : i32
    return %c0_i32, %c0_i32_0 : i32, i32
  }
}

</mosaic_0001>

<llo_original>
// kernel: tpu_custom_call.1
$region0: #{tpu_custom_call.1}
  #allocation0 [shape = 'u32[]', space=smem, size = 0x4, offset = 0x4, fixed_abs, tag = 'smem constant byte address 0x4 - core index']
  #allocation1 [shape = 'u32[144,128]{1,0:T(1,128)}', space=vmem, size = 0x12000, scoped, tag = 'internal scratch']
  #allocation2 [shape = 'f32[64,32]{1,0:T(8,128)}', space=vmem, size = 0x8000, scoped, tag = 'scratch operand']
  #allocation3 [shape = 's32[2]{0}', space=sflag, size = 0x8, scoped, tag = 'scratch operand']
  #allocation4 [shape = 's32[1]{0}', space=sflag, size = 0x4, scoped, tag = 'scoped memory for tpu_custom_call.1']
  #allocation5 [shape = 'u8[512]{0}', space=smem, size = 0x200, scoped, tag = 'prefetched SMEM operand 0']
  #allocation13 [shape = 's32[]', space=sflag, size = 0x4, offset = 0, fixed_abs, tag = 'sflag constant byte address 0x0 - dummy sync flag']
  #allocation14 [shape = 's32[]', space=sflag, size = 0x4, offset = 0, fixed_abs, tag = 'sflag constant byte address 0x0 - dummy sync flag']
  #allocation15 [shape = 'u32[]', space=smem, size = 0x4, offset = 0x44, fixed_abs, tag = 'smem constant byte address 0x44 - assertion arg 0']
  #allocation16 [shape = 'u32[]', space=smem, size = 0x4, offset = 0x48, fixed_abs, tag = 'smem constant byte address 0x48 - assertion arg 1']
  #allocation17 [shape = 's32[]', space=sflag, size = 0x4, offset = 0, fixed_abs, tag = 'sflag constant byte address 0x0 - dummy sync flag']
  #allocation18 [shape = 's32[]', space=sflag, size = 0x4, offset = 0, fixed_abs, tag = 'sflag constant byte address 0x0 - dummy sync flag']
  #allocation19 [shape = 's32[]', space=sflag, size = 0x4, offset = 0, fixed_abs, tag = 'sflag constant byte address 0x0 - dummy sync flag']
  #allocation20 [shape = 's32[]', space=sflag, size = 0x4, offset = 0, fixed_abs, tag = 'sflag constant byte address 0x0 - dummy sync flag']
  %s0 = inlined_call_operand.hbm [shape: s32[64], index: 0, kind: input, shape index: {}]
  %s1 = inlined_call_operand.hbm [shape: f32[32,32], index: 1, kind: input, shape index: {}]
  %s2 = inlined_call_operand.hbm [shape: f32[32,32], index: 2, kind: input, shape index: {}]
  %s3 = inlined_call_operand.vmem [shape: f32[1,32], index: 3, kind: input, shape index: {}]
  %s4 = inlined_call_operand.hbm [shape: f32[32,32], index: 4, kind: input, shape index: {}]
  %s5 = inlined_call_operand.vmem [shape: f32[1,32], index: 5, kind: input, shape index: {}]
  %s6 = inlined_call_operand.hbm [shape: f32[32,128], index: 6, kind: input, shape index: {}]
  %s7 = inlined_call_operand.vmem [shape: f32[1,128], index: 7, kind: input, shape index: {}]
  %s8 = inlined_call_operand.hbm [shape: f32[8,128], index: 8, kind: output, shape index: {}]
  %s9 = sld [smem:[#allocation0]]
  $region69: #{tpu_custom_call.1} parent=0
    _
  %s11 = ssub.s32 1, %s9
  %s12 = scalar_select 0, %s11, %s9
  %14 = dma.hbm_to_smem %s0, 16, [#allocation5], [#allocation4]
  %15 = dma.done [#allocation4], 16
  %16 = sfence
  $region1: #{tpu_custom_call.1} parent=0
    #allocation6 [shape = 'u8[16384]{0}', space=vmem, size = 0x4000, scoped, tag = 'input window, operand 2, single buffered']
    #allocation7 [shape = 's32[1]{0}', space=sflag, size = 0x4, scoped, tag = 'scoped memory for tpu_custom_call.1']
    #allocation8 [shape = 's32[1]{0}', space=sflag, size = 0x4, scoped, tag = 'scoped memory for tpu_custom_call.1']
    #allocation9 [shape = 'u8[16384]{0}', space=vmem, size = 0x4000, scoped, tag = 'input window, operand 4, single buffered']
    #allocation10 [shape = 's32[1]{0}', space=sflag, size = 0x4, scoped, tag = 'scoped memory for tpu_custom_call.1']
    #allocation11 [shape = 'u8[16384]{0}', space=vmem, size = 0x4000, scoped, tag = 'input window, operand 6, single buffered']
    #allocation12 [shape = 'u8[4096]{0}', space=vmem, size = 0x1000, scoped, tag = 'output window, operand 0, single buffered']
    %17 = vsyncpa [#allocation7], 0
    %18 = vsyncpa [#allocation10], 0
    %19 = vsyncpa [#allocation8], 0
    // Predicated region
    $region2: #{tpu_custom_call.1} parent=1 // pred_check
      _
    $region3: #{tpu_custom_call.1} parent=1 // pred_check_branch
      %21 = sbr.rel (0) target = $region5
    $region4: #{tpu_custom_call.1} parent=1 // pred_region
      %s23 = ssub.s32 512, 512
      %24 = vsyncadd [#allocation7], %s23
      %s25 = sshll.u32 [#allocation6], 4
      %s26 = int_to_ptr.vmem [resolvable:$true] %s25
      %31 = dma.hbm_to_vmem [thread:$0]  %s2, 512, %s26, [#allocation7], 128, 128, 8
    $region5: #{tpu_custom_call.1} parent=1 // pred_fallthru
      _
    // Predicated region
    $region6: #{tpu_custom_call.1} parent=1 // pred_check
      _
    $region7: #{tpu_custom_call.1} parent=1 // pred_check_branch
      %33 = sbr.rel (0) target = $region9
    $region8: #{tpu_custom_call.1} parent=1 // pred_region
      _
    $region9: #{tpu_custom_call.1} parent=1 // pred_fallthru
      _
    // Predicated region
    $region10: #{tpu_custom_call.1} parent=1 // pred_check
      _
    $region11: #{tpu_custom_call.1} parent=1 // pred_check_branch
      %35 = sbr.rel (0) target = $region13
    $region12: #{tpu_custom_call.1} parent=1 // pred_region
      %s37 = ssub.s32 512, 512
      %38 = vsyncadd [#allocation10], %s37
      %s39 = sshll.u32 [#allocation9], 4
      %s40 = int_to_ptr.vmem [resolvable:$true] %s39
      %45 = dma.hbm_to_vmem [thread:$0]  %s4, 512, %s40, [#allocation10], 128, 128, 8
    $region13: #{tpu_custom_call.1} parent=1 // pred_fallthru
      _
    // Predicated region
    $region14: #{tpu_custom_call.1} parent=1 // pred_check
      _
    $region15: #{tpu_custom_call.1} parent=1 // pred_check_branch
      %47 = sbr.rel (0) target = $region17
    $region16: #{tpu_custom_call.1} parent=1 // pred_region
      _
    $region17: #{tpu_custom_call.1} parent=1 // pred_fallthru
      _
    // Predicated region
    $region18: #{tpu_custom_call.1} parent=1 // pred_check
      _
    $region19: #{tpu_custom_call.1} parent=1 // pred_check_branch
      %49 = sbr.rel (0) target = $region21
    $region20: #{tpu_custom_call.1} parent=1 // pred_region
      %s51 = ssub.s32 512, 512
      %52 = vsyncadd [#allocation10], %s51
      %s53 = sshll.u32 [#allocation11], 4
      %s54 = int_to_ptr.vmem [resolvable:$true] %s53
      %59 = dma.hbm_to_vmem [thread:$0]  %s6, 512, %s54, [#allocation10], 128, 128, 8
    $region21: #{tpu_custom_call.1} parent=1 // pred_fallthru
      _
    // Predicated region
    $region22: #{tpu_custom_call.1} parent=1 // pred_check
      _
    $region23: #{tpu_custom_call.1} parent=1 // pred_check_branch
      %61 = sbr.rel (0) target = $region25
    $region24: #{tpu_custom_call.1} parent=1 // pred_region
      _
    $region25: #{tpu_custom_call.1} parent=1 // pred_fallthru
      _
    // Predicated region
    $region26: #{tpu_custom_call.1} parent=1 // pred_check
      _
    $region27: #{tpu_custom_call.1} parent=1 // pred_check_branch
      %63 = sbr.rel (0) target = $region29
    $region28: #{tpu_custom_call.1} parent=1 // pred_region
      %64 = dma.done [#allocation7], 512
    $region29: #{tpu_custom_call.1} parent=1 // pred_fallthru
      _
    // Predicated region
    $region30: #{tpu_custom_call.1} parent=1 // pred_check
      _
    $region31: #{tpu_custom_call.1} parent=1 // pred_check_branch
      %66 = sbr.rel (0) target = $region33
    $region32: #{tpu_custom_call.1} parent=1 // pred_region
      %67 = dma.done [#allocation10], 512
    $region33: #{tpu_custom_call.1} parent=1 // pred_fallthru
      _
    // Predicated region
    $region34: #{tpu_custom_call.1} parent=1 // pred_check
      _
    $region35: #{tpu_custom_call.1} parent=1 // pred_check_branch
      %69 = sbr.rel (0) target = $region37
    $region36: #{tpu_custom_call.1} parent=1 // pred_region
      %70 = dma.done [#allocation10], 512
    $region37: #{tpu_custom_call.1} parent=1 // pred_fallthru
      _
    %s71 = sld [smem:[#allocation5]]
    %s72 = smul.addr %s71, 16
    %s73 = scalar_lea.hbm %s1, %s72
    // Predicated region
    $region38: #{tpu_custom_call.1} parent=1 // pred_check
      _
    $region39: #{tpu_custom_call.1} parent=1 // pred_check_branch
      %75 = sbr.rel target = $region41
    $region40: #{tpu_custom_call.1} parent=1 // pred_region
      %76 = sst [smem:[#allocation15]] [#allocation14]
      %77 = sst [smem:[#allocation16]] [#allocation13]
    $region41: #{tpu_custom_call.1} parent=1 // pred_fallthru
      _
    %79 = shalt.err (0)
    %s81 = sshll.u32 [#allocation2], 4
    %s82 = int_to_ptr.vmem [resolvable:$true] %s81
    %84 = dma.hbm_to_vmem [thread:$0]  %s73, 16, %s82, [#allocation3]
    %s85 = sld [smem:[#allocation5 + $0x1]]
    %s86 = smul.addr %s85, 16
    %s87 = scalar_lea.hbm %s1, %s86
    %s88 = scalar_lea.vmem [#allocation2], 1
    %s89 = scalar_lea.sflag [#allocation3], 1
    // Predicated region
    $region42: #{tpu_custom_call.1} parent=1 // pred_check
      _
    $region43: #{tpu_custom_call.1} parent=1 // pred_check_branch
      %91 = sbr.rel target = $region45
    $region44: #{tpu_custom_call.1} parent=1 // pred_region
      %92 = sst [smem:[#allocation15]] [#allocation18]
      %93 = sst [smem:[#allocation16]] [#allocation17]
    $region45: #{tpu_custom_call.1} parent=1 // pred_fallthru
      _
    %95 = shalt.err (0)
    %s97 = sshll.u32 %s88, 4
    %s98 = int_to_ptr.vmem [resolvable:$true] %s97
    %100 = dma.hbm_to_vmem [thread:$0]  %s87, 16, %s98, %s89
    loop: start=0, step=1, limit=64
    $region46: #{tpu_custom_call.1} parent=1 // loop_pre_header
      _
    $region47: #{tpu_custom_call.1} parent=1 // loop_header
      %s102 = sphi 0, %s106
      %p103 = scmp.ge.s32.totalorder %s102, 64
    $region48: #{tpu_custom_call.1} parent=1 // loop_header_branch
      %105 = sbr.rel (%p103) target = $region52
    $region49: #{tpu_custom_call.1} parent=1 // loop_body
      %p107 = scmp.lt.s32.totalorder %s102, 0
      %s108 = ssub.s32 0, %s102
      %s109 = scalar_select %p107, %s108, %s102
      %s110 = sand.u32 %s109, 1
      %s111 = ssub.s32 0, %s110
      %s112 = scalar_select %p107, %s111, %s110
      %s113 = scalar_lea.sflag [#allocation3], %s112
      %s114 = smul.u32 1, 1
      %s115 = sshll.u32 %s114, 4
      %116 = dma.done %s113, %s115
      %s117 = sadd.s32 %s102, 2
      %p118 = scmp.lt.s32.totalorder %s117, 64
      // Predicated region
      $region53: #{tpu_custom_call.1} parent=49 // pred_check
        %p119 = pneg %p118
      $region54: #{tpu_custom_call.1} parent=49 // pred_check_branch
        %121 = sbr.rel (%p119) target = $region56
      $region55: #{tpu_custom_call.1} parent=49 // pred_region
        %s122 = sld [smem:[#allocation5 + %s117]]
        %s123 = smul.addr %s122, 16
        %s124 = scalar_lea.hbm %s1, %s123
        %s125 = scalar_lea.vmem [#allocation2], %s117
        // Predicated region
        $region57: #{tpu_custom_call.1} parent=55 // pred_check
          _
        $region58: #{tpu_custom_call.1} parent=55 // pred_check_branch
          %127 = sbr.rel target = $region60
        $region59: #{tpu_custom_call.1} parent=55 // pred_region
          %128 = sst [smem:[#allocation15]] [#allocation20]
          %129 = sst [smem:[#allocation16]] [#allocation19]
        $region60: #{tpu_custom_call.1} parent=55 // pred_fallthru
          _
        %131 = shalt.err (0)
        %s133 = sshll.u32 %s125, 4
        %s134 = int_to_ptr.vmem [resolvable:$true] %s133
        %136 = dma.hbm_to_vmem [thread:$0]  %s124, 16, %s134, %s113
      $region56: #{tpu_custom_call.1} parent=49 // pred_fallthru
        _
    $region50: #{tpu_custom_call.1} parent=1 // loop_footer
      %s106 = sadd.s32 1, %s102
    $region51: #{tpu_custom_call.1} parent=1 // loop_footer_branch
      %101 = sbr.rel target = $region47
    $region52: #{tpu_custom_call.1} parent=1 // loop_exit
      _
    %v137 = vlaneseq
    %v138 = vand.u32 %v137, 127
    %v139 = vlaneseq
    %v140 = vshrl.u32 %v139, 7
    %v141 = vmul.u32 %v140, 8
    %vm142 = vcmp.ge.s32.totalorder %v138, %v141
    %v143 = vadd.s32 %v140, 1
    %v144 = vmul.u32 %v143, 8
    %vm145 = vcmp.lt.s32.totalorder %v138, %v144
    %vm146 = vmand %vm142, %vm145
    %v147 = vsel %vm146, 0.125, 0.0
    %v148 = vld [vmem:[#allocation2] sm:$0xff]
    %v149 = vld [vmem:[#allocation2 + $0x8] sm:$0xff]
    %v150 = vld [vmem:[#allocation2 + $0x10] sm:$0xff]
    %v151 = vld [vmem:[#allocation2 + $0x18] sm:$0xff]
    %v152 = vld [vmem:[#allocation2 + $0x20] sm:$0xff]
    %v153 = vld [vmem:[#allocation2 + $0x28] sm:$0xff]
    %v154 = vld [vmem:[#allocation2 + $0x30] sm:$0xff]
    %v155 = vld [vmem:[#allocation2 + $0x38] sm:$0xff]
    %vm156 = vcmask 523264
    %v158 = vsel %vm156, %v147, 0
    %160 = vmatprep.subr.mxu0 0.0
    %161 = vmatpush1.msra.mxu0 %v148
    %162 = vmatprep.subr.mxu0 0.0
    %163 = vmatpush1.msra.mxu0 %v149
    %164 = vmatprep.subr.mxu0 0.0
    %165 = vmatpush1.msra.mxu0 %v150
    %166 = vmatprep.subr.mxu0 0.0
    %167 = vmatpush1.msra.mxu0 %v151
    %168 = vmatprep.subr.mxu0 0.0
    %169 = vmatpush1.msra.mxu0 %v152
    %170 = vmatprep.subr.mxu0 0.0
    %171 = vmatpush1.msra.mxu0 %v153
    %172 = vmatprep.subr.mxu0 0.0
    %173 = vmatpush1.msra.mxu0 %v154
    %174 = vmatprep.subr.mxu0 0.0
    %175 = vmatpush1.msra.mxu0 %v155
    %176 = vmatprep.subr.mxu0 0.0
    %177 = vmatpush1.msra.mxu0 0.0
    %178 = vmatprep.subr.mxu0 0.0
    %179 = vmatpush1.msra.mxu0 0.0
    %180 = vmatprep.subr.mxu0 0.0
    %181 = vmatpush1.msra.mxu0 0.0
    %182 = vmatprep.subr.mxu0 0.0
    %183 = vmatpush1.msra.mxu0 0.0
    %184 = vmatprep.subr.mxu0 0.0
    %185 = vmatpush1.msra.mxu0 0.0
    %186 = vmatprep.subr.mxu0 0.0
    %187 = vmatpush1.msra.mxu0 0.0
    %188 = vmatprep.subr.mxu0 0.0
    %189 = vmatpush1.msra.mxu0 0.0
    %190 = vmatprep.subr.mxu0 0.0
    %191 = vmatpush1.msra.mxu0 0.0
    %192 = vmatprep.subr.mxu0 0.0
    %193 = vmatpush1.msra.mxu0 0.0
    %194 = vmatprep.subr.mxu0 0.0
    %195 = vmatpush1.msra.mxu0 0.0
    %196 = vmatprep.subr.mxu0 0.0
    %197 = vmatpush1.msra.mxu0 0.0
    %198 = vmatprep.subr.mxu0 0.0
    %199 = vmatpush1.msra.mxu0 0.0
    %200 = vmatprep.subr.mxu0 0.0
    %201 = vmatpush1.msra.mxu0 0.0
    %202 = vmatprep.subr.mxu0 0.0
    %203 = vmatpush1.msra.mxu0 0.0
    %204 = vmatprep.subr.mxu0 0.0
    %205 = vmatpush1.msra.mxu0 0.0
    %206 = vmatprep.subr.mxu0 0.0
    %207 = vmatpush1.msra.mxu0 0.0
    %208 = vmatprep.subr.mxu0 0.0
    %209 = vmatpush1.msra.mxu0 0.0
    %210 = vmatprep.subr.mxu0 0.0
    %211 = vmatpush1.msra.mxu0 0.0
    %212 = vmatprep.subr.mxu0 0.0
    %213 = vmatpush1.msra.mxu0 0.0
    %214 = vmatprep.subr.mxu0 0.0
    %215 = vmatpush1.msra.mxu0 0.0
    %216 = vmatprep.subr.mxu0 0.0
    %217 = vmatpush1.msra.mxu0 0.0
    %218 = vmatprep.subr.mxu0 0.0
    %219 = vmatpush1.msra.mxu0 0.0
    %220 = vmatprep.subr.mxu0 0.0
    %221 = vmatpush1.msra.mxu0 0.0
    %222 = vmatprep.subr.mxu0 0.0
    %223 = vmatpush1.msra.mxu0 0.0
    %224 = vmatprep.mubr.f32.mxu0 0.0
    %225 = vmatmul.mubr.f32.gmra.mrb[0].mxu0 %v158
    %v226 = vpop.f32.mrb[0].mxu0
    %v227 = vadd.f32 0.0, %v226
    %v228 = vpop.f32.mrb[0].mxu0
    %229 = vdwg.mxu0
    %v230 = vld [vmem:[#allocation6] sm:$0xff]
    %v231 = vld [vmem:[#allocation6 + $0x8] sm:$0xff]
    %v232 = vld [vmem:[#allocation6 + $0x10] sm:$0xff]
    %v233 = vld [vmem:[#allocation6 + $0x18] sm:$0xff]
    %v234 = vld [vmem:[%s3] sm:$0x1]
    %v236 = vlaneseq
    %v237 = vshrl.u32 %v236, 7
    %v238 = vsub.s32 0, %v237
    %v239 = vrot.slane %v234, %v238
    %vm241 = vcmask 261120
    %v243 = vsel %vm241, %v227, 0
    %245 = vmatprep.subr.mxu0 0.0
    %246 = vmatpush1.msra.mxu0 %v230
    %247 = vmatprep.subr.mxu0 0.0
    %248 = vmatpush1.msra.mxu0 %v231
    %249 = vmatprep.subr.mxu0 0.0
    %250 = vmatpush1.msra.mxu0 %v232
    %251 = vmatprep.subr.mxu0 0.0
    %252 = vmatpush1.msra.mxu0 %v233
    %253 = vmatprep.subr.mxu0 0.0
    %254 = vmatpush1.msra.mxu0 0.0
    %255 = vmatprep.subr.mxu0 0.0
    %256 = vmatpush1.msra.mxu0 0.0
    %257 = vmatprep.subr.mxu0 0.0
    %258 = vmatpush1.msra.mxu0 0.0
    %259 = vmatprep.subr.mxu0 0.0
    %260 = vmatpush1.msra.mxu0 0.0
    %261 = vmatprep.subr.mxu0 0.0
    %262 = vmatpush1.msra.mxu0 0.0
    %263 = vmatprep.subr.mxu0 0.0
    %264 = vmatpush1.msra.mxu0 0.0
    %265 = vmatprep.subr.mxu0 0.0
    %266 = vmatpush1.msra.mxu0 0.0
    %267 = vmatprep.subr.mxu0 0.0
    %268 = vmatpush1.msra.mxu0 0.0
    %269 = vmatprep.subr.mxu0 0.0
    %270 = vmatpush1.msra.mxu0 0.0
    %271 = vmatprep.subr.mxu0 0.0
    %272 = vmatpush1.msra.mxu0 0.0
    %273 = vmatprep.subr.mxu0 0.0
    %274 = vmatpush1.msra.mxu0 0.0
    %275 = vmatprep.subr.mxu0 0.0
    %276 = vmatpush1.msra.mxu0 0.0
    %277 = vmatprep.subr.mxu0 0.0
    %278 = vmatpush1.msra.mxu0 0.0
    %279 = vmatprep.subr.mxu0 0.0
    %280 = vmatpush1.msra.mxu0 0.0
    %281 = vmatprep.subr.mxu0 0.0
    %282 = vmatpush1.msra.mxu0 0.0
    %283 = vmatprep.subr.mxu0 0.0
    %284 = vmatpush1.msra.mxu0 0.0
    %285 = vmatprep.subr.mxu0 0.0
    %286 = vmatpush1.msra.mxu0 0.0
    %287 = vmatprep.subr.mxu0 0.0
    %288 = vmatpush1.msra.mxu0 0.0
    %289 = vmatprep.subr.mxu0 0.0
    %290 = vmatpush1.msra.mxu0 0.0
    %291 = vmatprep.subr.mxu0 0.0
    %292 = vmatpush1.msra.mxu0 0.0
    %293 = vmatprep.subr.mxu0 0.0
    %294 = vmatpush1.msra.mxu0 0.0
    %295 = vmatprep.subr.mxu0 0.0
    %296 = vmatpush1.msra.mxu0 0.0
    %297 = vmatprep.subr.mxu0 0.0
    %298 = vmatpush1.msra.mxu0 0.0
    %299 = vmatprep.subr.mxu0 0.0
    %300 = vmatpush1.msra.mxu0 0.0
    %301 = vmatprep.subr.mxu0 0.0
    %302 = vmatpush1.msra.mxu0 0.0
    %303 = vmatprep.subr.mxu0 0.0
    %304 = vmatpush1.msra.mxu0 0.0
    %305 = vmatprep.subr.mxu0 0.0
    %306 = vmatpush1.msra.mxu0 0.0
    %307 = vmatprep.subr.mxu0 0.0
    %308 = vmatpush1.msra.mxu0 0.0
    %309 = vmatprep.mubr.f32.mxu0 0.0
    %310 = vmatmul.mubr.f32.gmra.mrb[0].mxu0 %v243
    %v311 = vpop.f32.mrb[0].mxu0
    %v312 = vadd.f32 %v239, %v311
    %v313 = vpop.f32.mrb[0].mxu0
    %314 = vdwg.mxu0
    %v315 = vmax.f32 %v312, 0.0
    %v316 = vld [vmem:[#allocation9] sm:$0xff]
    %v317 = vld [vmem:[#allocation9 + $0x8] sm:$0xff]
    %v318 = vld [vmem:[#allocation9 + $0x10] sm:$0xff]
    %v319 = vld [vmem:[#allocation9 + $0x18] sm:$0xff]
    %v320 = vld [vmem:[%s5] sm:$0x1]
    %v322 = vlaneseq
    %v323 = vshrl.u32 %v322, 7
    %v324 = vsub.s32 0, %v323
    %v325 = vrot.slane %v320, %v324
    %v328 = vsel %vm241, %v315, 0
    %330 = vmatprep.subr.mxu0 0.0
    %331 = vmatpush1.msra.mxu0 %v316
    %332 = vmatprep.subr.mxu0 0.0
    %333 = vmatpush1.msra.mxu0 %v317
    %334 = vmatprep.subr.mxu0 0.0
    %335 = vmatpush1.msra.mxu0 %v318
    %336 = vmatprep.subr.mxu0 0.0
    %337 = vmatpush1.msra.mxu0 %v319
    %338 = vmatprep.subr.mxu0 0.0
    %339 = vmatpush1.msra.mxu0 0.0
    %340 = vmatprep.subr.mxu0 0.0
    %341 = vmatpush1.msra.mxu0 0.0
    %342 = vmatprep.subr.mxu0 0.0
    %343 = vmatpush1.msra.mxu0 0.0
    %344 = vmatprep.subr.mxu0 0.0
    %345 = vmatpush1.msra.mxu0 0.0
    %346 = vmatprep.subr.mxu0 0.0
    %347 = vmatpush1.msra.mxu0 0.0
    %348 = vmatprep.subr.mxu0 0.0
    %349 = vmatpush1.msra.mxu0 0.0
    %350 = vmatprep.subr.mxu0 0.0
    %351 = vmatpush1.msra.mxu0 0.0
    %352 = vmatprep.subr.mxu0 0.0
    %353 = vmatpush1.msra.mxu0 0.0
    %354 = vmatprep.subr.mxu0 0.0
    %355 = vmatpush1.msra.mxu0 0.0
    %356 = vmatprep.subr.mxu0 0.0
    %357 = vmatpush1.msra.mxu0 0.0
    %358 = vmatprep.subr.mxu0 0.0
    %359 = vmatpush1.msra.mxu0 0.0
    %360 = vmatprep.subr.mxu0 0.0
    %361 = vmatpush1.msra.mxu0 0.0
    %362 = vmatprep.subr.mxu0 0.0
    %363 = vmatpush1.msra.mxu0 0.0
    %364 = vmatprep.subr.mxu0 0.0
    %365 = vmatpush1.msra.mxu0 0.0
    %366 = vmatprep.subr.mxu0 0.0
    %367 = vmatpush1.msra.mxu0 0.0
    %368 = vmatprep.subr.mxu0 0.0
    %369 = vmatpush1.msra.mxu0 0.0
    %370 = vmatprep.subr.mxu0 0.0
    %371 = vmatpush1.msra.mxu0 0.0
    %372 = vmatprep.subr.mxu0 0.0
    %373 = vmatpush1.msra.mxu0 0.0
    %374 = vmatprep.subr.mxu0 0.0
    %375 = vmatpush1.msra.mxu0 0.0
    %376 = vmatprep.subr.mxu0 0.0
    %377 = vmatpush1.msra.mxu0 0.0
    %378 = vmatprep.subr.mxu0 0.0
    %379 = vmatpush1.msra.mxu0 0.0
    %380 = vmatprep.subr.mxu0 0.0
    %381 = vmatpush1.msra.mxu0 0.0
    %382 = vmatprep.subr.mxu0 0.0
    %383 = vmatpush1.msra.mxu0 0.0
    %384 = vmatprep.subr.mxu0 0.0
    %385 = vmatpush1.msra.mxu0 0.0
    %386 = vmatprep.subr.mxu0 0.0
    %387 = vmatpush1.msra.mxu0 0.0
    %388 = vmatprep.subr.mxu0 0.0
    %389 = vmatpush1.msra.mxu0 0.0
    %390 = vmatprep.subr.mxu0 0.0
    %391 = vmatpush1.msra.mxu0 0.0
    %392 = vmatprep.subr.mxu0 0.0
    %393 = vmatpush1.msra.mxu0 0.0
    %394 = vmatprep.mubr.f32.mxu0 0.0
    %395 = vmatmul.mubr.f32.gmra.mrb[0].mxu0 %v328
    %v396 = vpop.f32.mrb[0].mxu0
    %v397 = vadd.f32 %v325, %v396
    %v398 = vpop.f32.mrb[0].mxu0
    %399 = vdwg.mxu0
    %v400 = vmax.f32 %v397, 0.0
    %v401 = vld [vmem:[#allocation11] sm:$0xff]
    %v402 = vld [vmem:[#allocation11 + $0x8] sm:$0xff]
    %v403 = vld [vmem:[#allocation11 + $0x10] sm:$0xff]
    %v404 = vld [vmem:[#allocation11 + $0x18] sm:$0xff]
    %v405 = vld [vmem:[%s7] sm:$0x1]
    %v407 = vlaneseq
    %v408 = vshrl.u32 %v407, 7
    %v409 = vsub.s32 0, %v408
    %v410 = vrot.slane %v405, %v409
    %v413 = vsel %vm241, %v400, 0
    %415 = vmatprep.subr.mxu0 0.0
    %416 = vmatpush1.msra.mxu0 %v401
    %417 = vmatprep.subr.mxu0 0.0
    %418 = vmatpush1.msra.mxu0 %v402
    %419 = vmatprep.subr.mxu0 0.0
    %420 = vmatpush1.msra.mxu0 %v403
    %421 = vmatprep.subr.mxu0 0.0
    %422 = vmatpush1.msra.mxu0 %v404
    %423 = vmatprep.subr.mxu0 0.0
    %424 = vmatpush1.msra.mxu0 0.0
    %425 = vmatprep.subr.mxu0 0.0
    %426 = vmatpush1.msra.mxu0 0.0
    %427 = vmatprep.subr.mxu0 0.0
    %428 = vmatpush1.msra.mxu0 0.0
    %429 = vmatprep.subr.mxu0 0.0
    %430 = vmatpush1.msra.mxu0 0.0
    %431 = vmatprep.subr.mxu0 0.0
    %432 = vmatpush1.msra.mxu0 0.0
    %433 = vmatprep.subr.mxu0 0.0
    %434 = vmatpush1.msra.mxu0 0.0
    %435 = vmatprep.subr.mxu0 0.0
    %436 = vmatpush1.msra.mxu0 0.0
    %437 = vmatprep.subr.mxu0 0.0
    %438 = vmatpush1.msra.mxu0 0.0
    %439 = vmatprep.subr.mxu0 0.0
    %440 = vmatpush1.msra.mxu0 0.0
    %441 = vmatprep.subr.mxu0 0.0
    %442 = vmatpush1.msra.mxu0 0.0
    %443 = vmatprep.subr.mxu0 0.0
    %444 = vmatpush1.msra.mxu0 0.0
    %445 = vmatprep.subr.mxu0 0.0
    %446 = vmatpush1.msra.mxu0 0.0
    %447 = vmatprep.subr.mxu0 0.0
    %448 = vmatpush1.msra.mxu0 0.0
    %449 = vmatprep.subr.mxu0 0.0
    %450 = vmatpush1.msra.mxu0 0.0
    %451 = vmatprep.subr.mxu0 0.0
    %452 = vmatpush1.msra.mxu0 0.0
    %453 = vmatprep.subr.mxu0 0.0
    %454 = vmatpush1.msra.mxu0 0.0
    %455 = vmatprep.subr.mxu0 0.0
    %456 = vmatpush1.msra.mxu0 0.0
    %457 = vmatprep.subr.mxu0 0.0
    %458 = vmatpush1.msra.mxu0 0.0
    %459 = vmatprep.subr.mxu0 0.0
    %460 = vmatpush1.msra.mxu0 0.0
    %461 = vmatprep.subr.mxu0 0.0
    %462 = vmatpush1.msra.mxu0 0.0
    %463 = vmatprep.subr.mxu0 0.0
    %464 = vmatpush1.msra.mxu0 0.0
    %465 = vmatprep.subr.mxu0 0.0
    %466 = vmatpush1.msra.mxu0 0.0
    %467 = vmatprep.subr.mxu0 0.0
    %468 = vmatpush1.msra.mxu0 0.0
    %469 = vmatprep.subr.mxu0 0.0
    %470 = vmatpush1.msra.mxu0 0.0
    %471 = vmatprep.subr.mxu0 0.0
    %472 = vmatpush1.msra.mxu0 0.0
    %473 = vmatprep.subr.mxu0 0.0
    %474 = vmatpush1.msra.mxu0 0.0
    %475 = vmatprep.subr.mxu0 0.0
    %476 = vmatpush1.msra.mxu0 0.0
    %477 = vmatprep.subr.mxu0 0.0
    %478 = vmatpush1.msra.mxu0 0.0
    %479 = vmatprep.mubr.f32.mxu0 0.0
    %480 = vmatmul.mubr.f32.gmra.mrb[0].mxu0 %v413
    %v481 = vpop.f32.mrb[0].mxu0
    %v482 = vadd.f32 %v410, %v481
    %v483 = vpop.f32.mrb[0].mxu0
    %484 = vdwg.mxu0
    %vm485 = vcmp.lt.s32.totalorder %v138, 2
    %v486 = vsel %vm485, %v482, -inf
    %487 = vmax.xlane.f32.xlu0 %v486
    %v488 = vpop.xlane.xlu0 %487
    %v489 = vsub.f32 %v486, %v488
    %v490 = vmul.f32 %v489, 1.442695
    %v491 = vpow.pop %v490
    %492 = vadd.xlane.f32.xlu0 %v491
    %v493 = vpop.xlane.xlu0 %492
    %v494 = vlog2.pop %v493
    %v495 = vmul.f32 %v494, 0.6931472
    %v496 = vsub.f32 %v489, %v495
    %v497 = vsel %vm485, %v496, 0.0
    %498 = vst [vmem:[#allocation12] sm:$0xff] %v497
    // Predicated region
    $region61: #{tpu_custom_call.1} parent=1 // pred_check
      _
    $region62: #{tpu_custom_call.1} parent=1 // pred_check_branch
      %500 = sbr.rel (0) target = $region64
    $region63: #{tpu_custom_call.1} parent=1 // pred_region
      %s502 = ssub.s32 128, 128
      %503 = vsyncadd [#allocation8], %s502
      %s505 = sshll.u32 [#allocation12], 4
      %s506 = int_to_ptr.vmem [resolvable:$true] %s505
      %508 = dma.vmem_to_hbm [thread:$0]  %s506, 128, %s8, [#allocation8]
    $region64: #{tpu_custom_call.1} parent=1 // pred_fallthru
      _
    // Predicated region
    $region65: #{tpu_custom_call.1} parent=1 // pred_check
      _
    $region66: #{tpu_custom_call.1} parent=1 // pred_check_branch
      %510 = sbr.rel (0) target = $region68
    $region67: #{tpu_custom_call.1} parent=1 // pred_region
      %511 = dma.done [#allocation8], 128
    $region68: #{tpu_custom_call.1} parent=1 // pred_fallthru
      _
    %512 = vsyncpa [#allocation7], 1
    %513 = vsyncpa [#allocation10], 1
    %514 = vsyncpa [#allocation8], 1
  %515 = vsyncmov [#allocation3]
  %s516 = vpop.sfrf %515
  %p517 = scmp.eq.s32.totalorder %s516, 0
  %p518 = pneg %p517
  %520 = shalt.err (%p518)
  %s521 = scalar_lea.sflag [#allocation3], 1
  %522 = vsyncmov %s521
  %s523 = vpop.sfrf %522
  %p524 = scmp.eq.s32.totalorder %s523, 0
  %p525 = pneg %p524
  %527 = shalt.err (%p525)

</llo_original>
